<compile_context>
chip_gen: v5e
topology: v5e:2x2
jax: 0.10.0
libtpu: 0.0.40
codegen_flags: <defaults>
</compile_context>

<pallas_src>
import functools
import math

import jax
import jax.numpy as jnp
from jax.experimental import pallas as pl
from jax.experimental.pallas import tpu as pltpu


def _round_up(x, m):
    return ((x + m - 1) // m) * m


def _largest_tile(total, multiple, cap):
    """Largest divisor of `total` that is a multiple of `multiple` and <= cap."""
    best = multiple
    t = multiple
    limit = min(total, cap)
    while t <= limit:
        if total % t == 0:
            best = t
        t += multiple
    return best


# -----------------------------------------------------------------------------
# Kernel 1: serial tanh recurrence — single invocation, everything VMEM-resident
# -----------------------------------------------------------------------------
def _recurrence_kernel(xproj_ref, h0_ref, whh_ref, hall_ref, hfinal_ref, *, unroll):
    """
    xproj_ref : (seq, bp, hp)  precomputed W_ih^T[token] + (b_ih + b_hh)
    h0_ref    : (bp, hp)       initial hidden state (zero-padded)
    whh_ref   : (hp, hp)       W_hh^T, zero-padded
    hall_ref  : (seq*bp, hp)   flat lane-dense slab of every H_t (output)
    hfinal_ref: (bp, hp)       final hidden state (output, aliases h0 in HBM)
    """
    seq, bp, hp = xproj_ref.shape

    def step(t, h):
        # H_t = tanh(x_proj_t + H_{t-1} @ W_hh^T); zero-padded hidden lanes stay 0.
        h_new = jnp.tanh(
            xproj_ref[t]
            + jnp.dot(h, whh_ref[...], preferred_element_type=jnp.float32)
        )
        row0 = pl.multiple_of(t * bp, 8)          # sublane-aligned flat store
        hall_ref[pl.ds(row0, bp), :] = h_new
        return h_new

    # TODO(synk): hold W_hh^T in the MXU weight registers across the serial
    # recurrence (pltpu.matmul_push_rhs once, matmul_acc_lhs/matmul_pop per
    # step) to drop seq-1 redundant RHS pushes from the critical path.
    hfinal_ref[...] = jax.lax.fori_loop(0, seq, step, h0_ref[...], unroll=unroll)


# -----------------------------------------------------------------------------
# Kernel 2: dense vocab head — tiled over (rows, vocab), both axes parallel
# -----------------------------------------------------------------------------
def _head_kernel(h_ref, w_ref, b_ref, o_ref):
    o_ref[...] = (
        jnp.dot(h_ref[...], w_ref[...], preferred_element_type=jnp.float32)
        + b_ref[...]
    ).astype(o_ref.dtype)


def rnn_model_forward(inputs, h0, params, vocab_size):
    """Forward pass of RNNModel.

    inputs: int32 (batch, seq)       token ids
    h0:     f32   (1, batch, hidden) initial RNN state (PyTorch convention)
    returns (output, state):
      output: f32 (seq*batch, vocab)
      state:  f32 (1, batch, hidden)
    """
    batch, seq = inputs.shape
    hidden = h0.shape[-1]
    f32 = jnp.float32

    # (8, 128) alignment: batch -> sublane multiple, hidden/vocab -> lane multiple.
    bp = _round_up(batch, 8)
    hp = _round_up(hidden, 128)
    vp = _round_up(vocab_size, 128)
    rows = seq * bp

    # Zero-padded, pre-transposed weights (zero padding keeps padded lanes inert).
    wih_t = jnp.zeros((vocab_size, hp), f32).at[:, :hidden].set(params["w_ih"].T)
    whh_t = jnp.zeros((hp, hp), f32).at[:hidden, :hidden].set(params["w_hh"].T)
    bh = jnp.zeros((hp,), f32).at[:hidden].set(params["b_ih"] + params["b_hh"])
    wout_t = jnp.zeros((hp, vp), f32).at[:hidden, :vocab_size].set(params["w_out"].T)
    bout = jnp.zeros((1, vp), f32).at[0, :vocab_size].set(params["b_out"])

    # one_hot(X_t) @ W_ih^T is a row lookup.  Pad the *token ids* (not the
    # activations) so the gather lands directly in the padded (seq, bp, hp)
    # layout with a single HBM materialization.  Padded-batch rows read token 0
    # and produce garbage hidden/logit rows; they are sliced off below.
    tokens_p = jnp.zeros((seq, bp), jnp.int32).at[:, :batch].set(inputs.T)
    x_proj = wih_t[tokens_p] + bh                       # (seq, bp, hp)

    h0_p = jnp.zeros((bp, hp), f32).at[:batch, :hidden].set(h0[0])

    vmem = pl.BlockSpec(memory_space=pltpu.MemorySpace.VMEM)

    # --- recurrence call: size the scoped VMEM limit to the resident footprint.
    rec_bytes = 4 * (seq * bp * hp      # x_proj
                     + bp * hp          # h0
                     + hp * hp          # W_hh^T
                     + rows * hp        # H_t slab (output)
                     + bp * hp)         # final state (output)
    rec_params = pltpu.CompilerParams(
        vmem_limit_bytes=int(min(2 * rec_bytes + (2 << 20), 128 << 20)))

    # Cap the unroll: full unroll only for short sequences; the recurrence is
    # serially dependent so overlap beyond ~1 step of lookahead buys nothing.
    unroll = True if seq <= 16 else 8

    h_all, h_final_p = pl.pallas_call(
        functools.partial(_recurrence_kernel, unroll=unroll),
        out_shape=(
            jax.ShapeDtypeStruct((rows, hp), f32),      # lane-dense H_t slab
            jax.ShapeDtypeStruct((bp, hp), f32),        # final hidden state
        ),
        in_specs=[vmem, vmem, vmem],                    # x_proj, h0, W_hh^T
        out_specs=(vmem, vmem),
        input_output_aliases={1: 1},                    # h0 buffer -> final state
        compiler_params=rec_params,
    )(x_proj, h0_p, whh_t)

    # --- dense head: tiled matmul over (rows, vocab); both axes are independent
    # ("parallel") so v7x's two TensorCores split the work, and W_out / logits
    # tiles are double-buffered by the BlockSpec pipeline instead of being
    # monolithically VMEM-resident.
    tile_r = _largest_tile(rows, 8, 512)
    tile_v = _largest_tile(vp, 128, 512)
    head_bytes = 4 * 2 * (tile_r * hp + hp * tile_v + tile_v + tile_r * tile_v)
    head_params = pltpu.CompilerParams(
        dimension_semantics=("parallel", "parallel"),
        vmem_limit_bytes=int(min(2 * head_bytes + (2 << 20), 128 << 20)))

    logits_p = pl.pallas_call(
        _head_kernel,
        out_shape=jax.ShapeDtypeStruct((rows, vp), f32),
        grid=(rows // tile_r, vp // tile_v),
        in_specs=[
            pl.BlockSpec((tile_r, hp), lambda i, j: (i, 0)),
            pl.BlockSpec((hp, tile_v), lambda i, j: (0, j)),
            pl.BlockSpec((1, tile_v), lambda i, j: (0, j)),
        ],
        out_specs=pl.BlockSpec((tile_r, tile_v), lambda i, j: (i, j)),
        compiler_params=head_params,
    )(h_all, wout_t, bout)

    # TODO(synk): for long sequences, interleave the head matmul with the
    # recurrence (feed completed H_t blocks into the vocab projection while
    # later steps still iterate) instead of this two-phase split.

    # Strip padding; row order (seq-major, then batch) matches Y.view(-1, H) @ dense.
    logits = logits_p.reshape(seq, bp, vp)[:, :batch, :vocab_size]
    output = logits.reshape(seq * batch, vocab_size)
    state = h_final_p[:batch, :hidden][None]            # (1, batch, hidden)
    return output, state


def init_params(key, vocab_size, hidden_size):
    """Deterministic init mirroring nn.RNN / nn.Linear shapes (uniform +/- 1/sqrt(H))."""
    ks = jax.random.split(key, 6)
    bound = 1.0 / math.sqrt(hidden_size)
    u = lambda k, shape: jax.random.uniform(k, shape, jnp.float32, -bound, bound)
    return {
        "w_ih": u(ks[0], (hidden_size, vocab_size)),   # nn.RNN weight_ih_l0
        "w_hh": u(ks[1], (hidden_size, hidden_size)),  # nn.RNN weight_hh_l0
        "b_ih": u(ks[2], (hidden_size,)),
        "b_hh": u(ks[3], (hidden_size,)),
        "w_out": u(ks[4], (vocab_size, hidden_size)),  # nn.Linear weight
        "b_out": u(ks[5], (vocab_size,)),
    }


def _reference_forward(inputs, h0, params, vocab_size):
    """Pure-JAX reference of the same forward (for correctness check)."""
    x = jax.nn.one_hot(inputs.T, vocab_size, dtype=jnp.float32)   # (seq, batch, vocab)
    bh = params["b_ih"] + params["b_hh"]

    def step(h, x_t):
        h_new = jnp.tanh(x_t @ params["w_ih"].T + h @ params["w_hh"].T + bh)
        return h_new, h_new

    h_final, ys = jax.lax.scan(step, h0[0], x)
    out = ys.reshape(-1, ys.shape[-1]) @ params["w_out"].T + params["b_out"]
    return out, h_final[None]


if __name__ == "__main__":
    vocab_size = 32
    hidden_size = 32
    batch = 4
    seq = 8

    key = jax.random.PRNGKey(0)
    k_tok, k_h0, k_par = jax.random.split(key, 3)

    inputs = jax.random.randint(k_tok, (batch, seq), 0, vocab_size, dtype=jnp.int32)
    h0 = jax.random.normal(k_h0, (1, batch, hidden_size), dtype=jnp.float32)
    params = init_params(k_par, vocab_size, hidden_size)

    output, state = rnn_model_forward(inputs, h0, params, vocab_size)
    output = jax.block_until_ready(output)
    state = jax.block_until_ready(state)

    ref_out, ref_state = _reference_forward(inputs, h0, params, vocab_size)
    assert output.shape == (seq * batch, vocab_size)
    assert state.shape == (1, batch, hidden_size)
    assert jnp.allclose(output, ref_out, atol=1e-5, rtol=1e-5)
    assert jnp.allclose(state, ref_state, atol=1e-5, rtol=1e-5)

    print("KERNEL_OK")
</pallas_src>

<mosaic_0001>
module attributes {stable_mosaic.version = 11 : i64} {
  func.func @_recurrence_kernel(%arg0: memref<8x8x128xf32, #tpu.memory_space<vmem>>, %arg1: memref<8x128xf32, #tpu.memory_space<vmem>>, %arg2: memref<128x128xf32, #tpu.memory_space<vmem>>, %arg3: memref<64x128xf32, #tpu.memory_space<vmem>>, %arg4: memref<8x128xf32, #tpu.memory_space<vmem>>) attributes {dimension_semantics = [], scalar_prefetch = 0 : i64, scratch_operands = 0 : i64, tpu.core_type = #tpu.core_type<tc>} {
    %c0 = arith.constant 0 : index
    %c0_0 = arith.constant 0 : index
    %0 = vector.load %arg1[%c0, %c0_0] : memref<8x128xf32, #tpu.memory_space<vmem>>, vector<8x128xf32>
    %c0_i32 = arith.constant 0 : i32
    %1 = arith.index_cast %c0_i32 : i32 to index
    %c0_1 = arith.constant 0 : index
    %c0_2 = arith.constant 0 : index
    %2 = vector.load %arg0[%1, %c0_1, %c0_2] : memref<8x8x128xf32, #tpu.memory_space<vmem>>, vector<1x8x128xf32>
    %3 = vector.shape_cast %2 : vector<1x8x128xf32> to vector<8x128xf32>
    %c0_3 = arith.constant 0 : index
    %c0_4 = arith.constant 0 : index
    %4 = vector.load %arg2[%c0_3, %c0_4] : memref<128x128xf32, #tpu.memory_space<vmem>>, vector<128x128xf32>
    %cst = arith.constant dense<0.000000e+00> : vector<8x128xf32>
    %5 = tpu.matmul %0, %4, %cst {dimension_numbers = #tpu.dot_dimension_numbers<[1], [0], [0], [1], [0, 0, 1, 1], [], []>} : vector<8x128xf32>, vector<128x128xf32>, vector<8x128xf32> -> vector<8x128xf32>
    %6 = arith.addf %3, %5 : vector<8x128xf32>
    %7 = math.tanh %6 : vector<8x128xf32>
    %c8_i32 = arith.constant 8 : i32
    %8 = arith.muli %c0_i32, %c8_i32 : i32
    %9 = tpu.assume_multiple %8, 8 : i32
    %10 = arith.index_cast %9 : i32 to index
    %c0_5 = arith.constant 0 : index
    %11 = vector.load %arg3[%10, %c0_5] : memref<64x128xf32, #tpu.memory_space<vmem>>, vector<8x128xf32>
    tpu.vector_store %arg3[%10, %c0_5], %7 {strides = array<i32>} : memref<64x128xf32, #tpu.memory_space<vmem>>, vector<8x128xf32>,
    %c1_i32 = arith.constant 1 : i32
    %12 = arith.index_cast %c1_i32 : i32 to index
    %c0_6 = arith.constant 0 : index
    %c0_7 = arith.constant 0 : index
    %13 = vector.load %arg0[%12, %c0_6, %c0_7] : memref<8x8x128xf32, #tpu.memory_space<vmem>>, vector<1x8x128xf32>
    %14 = vector.shape_cast %13 : vector<1x8x128xf32> to vector<8x128xf32>
    %c0_8 = arith.constant 0 : index
    %c0_9 = arith.constant 0 : index
    %15 = vector.load %arg2[%c0_8, %c0_9] : memref<128x128xf32, #tpu.memory_space<vmem>>, vector<128x128xf32>
    %cst_10 = arith.constant dense<0.000000e+00> : vector<8x128xf32>
    %16 = tpu.matmul %7, %15, %cst_10 {dimension_numbers = #tpu.dot_dimension_numbers<[1], [0], [0], [1], [0, 0, 1, 1], [], []>} : vector<8x128xf32>, vector<128x128xf32>, vector<8x128xf32> -> vector<8x128xf32>
    %17 = arith.addf %14, %16 : vector<8x128xf32>
    %18 = math.tanh %17 : vector<8x128xf32>
    %c8_i32_11 = arith.constant 8 : i32
    %19 = arith.muli %c1_i32, %c8_i32_11 : i32
    %20 = tpu.assume_multiple %19, 8 : i32
    %21 = arith.index_cast %20 : i32 to index
    %c0_12 = arith.constant 0 : index
    %22 = vector.load %arg3[%21, %c0_12] : memref<64x128xf32, #tpu.memory_space<vmem>>, vector<8x128xf32>
    tpu.vector_store %arg3[%21, %c0_12], %18 {strides = array<i32>} : memref<64x128xf32, #tpu.memory_space<vmem>>, vector<8x128xf32>,
    %c2_i32 = arith.constant 2 : i32
    %23 = arith.index_cast %c2_i32 : i32 to index
    %c0_13 = arith.constant 0 : index
    %c0_14 = arith.constant 0 : index
    %24 = vector.load %arg0[%23, %c0_13, %c0_14] : memref<8x8x128xf32, #tpu.memory_space<vmem>>, vector<1x8x128xf32>
    %25 = vector.shape_cast %24 : vector<1x8x128xf32> to vector<8x128xf32>
    %c0_15 = arith.constant 0 : index
    %c0_16 = arith.constant 0 : index
    %26 = vector.load %arg2[%c0_15, %c0_16] : memref<128x128xf32, #tpu.memory_space<vmem>>, vector<128x128xf32>
    %cst_17 = arith.constant dense<0.000000e+00> : vector<8x128xf32>
    %27 = tpu.matmul %18, %26, %cst_17 {dimension_numbers = #tpu.dot_dimension_numbers<[1], [0], [0], [1], [0, 0, 1, 1], [], []>} : vector<8x128xf32>, vector<128x128xf32>, vector<8x128xf32> -> vector<8x128xf32>
    %28 = arith.addf %25, %27 : vector<8x128xf32>
    %29 = math.tanh %28 : vector<8x128xf32>
    %c8_i32_18 = arith.constant 8 : i32
    %30 = arith.muli %c2_i32, %c8_i32_18 : i32
    %31 = tpu.assume_multiple %30, 8 : i32
    %32 = arith.index_cast %31 : i32 to index
    %c0_19 = arith.constant 0 : index
    %33 = vector.load %arg3[%32, %c0_19] : memref<64x128xf32, #tpu.memory_space<vmem>>, vector<8x128xf32>
    tpu.vector_store %arg3[%32, %c0_19], %29 {strides = array<i32>} : memref<64x128xf32, #tpu.memory_space<vmem>>, vector<8x128xf32>,
    %c3_i32 = arith.constant 3 : i32
    %34 = arith.index_cast %c3_i32 : i32 to index
    %c0_20 = arith.constant 0 : index
    %c0_21 = arith.constant 0 : index
    %35 = vector.load %arg0[%34, %c0_20, %c0_21] : memref<8x8x128xf32, #tpu.memory_space<vmem>>, vector<1x8x128xf32>
    %36 = vector.shape_cast %35 : vector<1x8x128xf32> to vector<8x128xf32>
    %c0_22 = arith.constant 0 : index
    %c0_23 = arith.constant 0 : index
    %37 = vector.load %arg2[%c0_22, %c0_23] : memref<128x128xf32, #tpu.memory_space<vmem>>, vector<128x128xf32>
    %cst_24 = arith.constant dense<0.000000e+00> : vector<8x128xf32>
    %38 = tpu.matmul %29, %37, %cst_24 {dimension_numbers = #tpu.dot_dimension_numbers<[1], [0], [0], [1], [0, 0, 1, 1], [], []>} : vector<8x128xf32>, vector<128x128xf32>, vector<8x128xf32> -> vector<8x128xf32>
    %39 = arith.addf %36, %38 : vector<8x128xf32>
    %40 = math.tanh %39 : vector<8x128xf32>
    %c8_i32_25 = arith.constant 8 : i32
    %41 = arith.muli %c3_i32, %c8_i32_25 : i32
    %42 = tpu.assume_multiple %41, 8 : i32
    %43 = arith.index_cast %42 : i32 to index
    %c0_26 = arith.constant 0 : index
    %44 = vector.load %arg3[%43, %c0_26] : memref<64x128xf32, #tpu.memory_space<vmem>>, vector<8x128xf32>
    tpu.vector_store %arg3[%43, %c0_26], %40 {strides = array<i32>} : memref<64x128xf32, #tpu.memory_space<vmem>>, vector<8x128xf32>,
    %c4_i32 = arith.constant 4 : i32
    %45 = arith.index_cast %c4_i32 : i32 to index
    %c0_27 = arith.constant 0 : index
    %c0_28 = arith.constant 0 : index
    %46 = vector.load %arg0[%45, %c0_27, %c0_28] : memref<8x8x128xf32, #tpu.memory_space<vmem>>, vector<1x8x128xf32>
    %47 = vector.shape_cast %46 : vector<1x8x128xf32> to vector<8x128xf32>
    %c0_29 = arith.constant 0 : index
    %c0_30 = arith.constant 0 : index
    %48 = vector.load %arg2[%c0_29, %c0_30] : memref<128x128xf32, #tpu.memory_space<vmem>>, vector<128x128xf32>
    %cst_31 = arith.constant dense<0.000000e+00> : vector<8x128xf32>
    %49 = tpu.matmul %40, %48, %cst_31 {dimension_numbers = #tpu.dot_dimension_numbers<[1], [0], [0], [1], [0, 0, 1, 1], [], []>} : vector<8x128xf32>, vector<128x128xf32>, vector<8x128xf32> -> vector<8x128xf32>
    %50 = arith.addf %47, %49 : vector<8x128xf32>
    %51 = math.tanh %50 : vector<8x128xf32>
    %c8_i32_32 = arith.constant 8 : i32
    %52 = arith.muli %c4_i32, %c8_i32_32 : i32
    %53 = tpu.assume_multiple %52, 8 : i32
    %54 = arith.index_cast %53 : i32 to index
    %c0_33 = arith.constant 0 : index
    %55 = vector.load %arg3[%54, %c0_33] : memref<64x128xf32, #tpu.memory_space<vmem>>, vector<8x128xf32>
    tpu.vector_store %arg3[%54, %c0_33], %51 {strides = array<i32>} : memref<64x128xf32, #tpu.memory_space<vmem>>, vector<8x128xf32>,
    %c5_i32 = arith.constant 5 : i32
    %56 = arith.index_cast %c5_i32 : i32 to index
    %c0_34 = arith.constant 0 : index
    %c0_35 = arith.constant 0 : index
    %57 = vector.load %arg0[%56, %c0_34, %c0_35] : memref<8x8x128xf32, #tpu.memory_space<vmem>>, vector<1x8x128xf32>
    %58 = vector.shape_cast %57 : vector<1x8x128xf32> to vector<8x128xf32>
    %c0_36 = arith.constant 0 : index
    %c0_37 = arith.constant 0 : index
    %59 = vector.load %arg2[%c0_36, %c0_37] : memref<128x128xf32, #tpu.memory_space<vmem>>, vector<128x128xf32>
    %cst_38 = arith.constant dense<0.000000e+00> : vector<8x128xf32>
    %60 = tpu.matmul %51, %59, %cst_38 {dimension_numbers = #tpu.dot_dimension_numbers<[1], [0], [0], [1], [0, 0, 1, 1], [], []>} : vector<8x128xf32>, vector<128x128xf32>, vector<8x128xf32> -> vector<8x128xf32>
    %61 = arith.addf %58, %60 : vector<8x128xf32>
    %62 = math.tanh %61 : vector<8x128xf32>
    %c8_i32_39 = arith.constant 8 : i32
    %63 = arith.muli %c5_i32, %c8_i32_39 : i32
    %64 = tpu.assume_multiple %63, 8 : i32
    %65 = arith.index_cast %64 : i32 to index
    %c0_40 = arith.constant 0 : index
    %66 = vector.load %arg3[%65, %c0_40] : memref<64x128xf32, #tpu.memory_space<vmem>>, vector<8x128xf32>
    tpu.vector_store %arg3[%65, %c0_40], %62 {strides = array<i32>} : memref<64x128xf32, #tpu.memory_space<vmem>>, vector<8x128xf32>,
    %c6_i32 = arith.constant 6 : i32
    %67 = arith.index_cast %c6_i32 : i32 to index
    %c0_41 = arith.constant 0 : index
    %c0_42 = arith.constant 0 : index
    %68 = vector.load %arg0[%67, %c0_41, %c0_42] : memref<8x8x128xf32, #tpu.memory_space<vmem>>, vector<1x8x128xf32>
    %69 = vector.shape_cast %68 : vector<1x8x128xf32> to vector<8x128xf32>
    %c0_43 = arith.constant 0 : index
    %c0_44 = arith.constant 0 : index
    %70 = vector.load %arg2[%c0_43, %c0_44] : memref<128x128xf32, #tpu.memory_space<vmem>>, vector<128x128xf32>
    %cst_45 = arith.constant dense<0.000000e+00> : vector<8x128xf32>
    %71 = tpu.matmul %62, %70, %cst_45 {dimension_numbers = #tpu.dot_dimension_numbers<[1], [0], [0], [1], [0, 0, 1, 1], [], []>} : vector<8x128xf32>, vector<128x128xf32>, vector<8x128xf32> -> vector<8x128xf32>
    %72 = arith.addf %69, %71 : vector<8x128xf32>
    %73 = math.tanh %72 : vector<8x128xf32>
    %c8_i32_46 = arith.constant 8 : i32
    %74 = arith.muli %c6_i32, %c8_i32_46 : i32
    %75 = tpu.assume_multiple %74, 8 : i32
    %76 = arith.index_cast %75 : i32 to index
    %c0_47 = arith.constant 0 : index
    %77 = vector.load %arg3[%76, %c0_47] : memref<64x128xf32, #tpu.memory_space<vmem>>, vector<8x128xf32>
    tpu.vector_store %arg3[%76, %c0_47], %73 {strides = array<i32>} : memref<64x128xf32, #tpu.memory_space<vmem>>, vector<8x128xf32>,
    %c7_i32 = arith.constant 7 : i32
    %78 = arith.index_cast %c7_i32 : i32 to index
    %c0_48 = arith.constant 0 : index
    %c0_49 = arith.constant 0 : index
    %79 = vector.load %arg0[%78, %c0_48, %c0_49] : memref<8x8x128xf32, #tpu.memory_space<vmem>>, vector<1x8x128xf32>
    %80 = vector.shape_cast %79 : vector<1x8x128xf32> to vector<8x128xf32>
    %c0_50 = arith.constant 0 : index
    %c0_51 = arith.constant 0 : index
    %81 = vector.load %arg2[%c0_50, %c0_51] : memref<128x128xf32, #tpu.memory_space<vmem>>, vector<128x128xf32>
    %cst_52 = arith.constant dense<0.000000e+00> : vector<8x128xf32>
    %82 = tpu.matmul %73, %81, %cst_52 {dimension_numbers = #tpu.dot_dimension_numbers<[1], [0], [0], [1], [0, 0, 1, 1], [], []>} : vector<8x128xf32>, vector<128x128xf32>, vector<8x128xf32> -> vector<8x128xf32>
    %83 = arith.addf %80, %82 : vector<8x128xf32>
    %84 = math.tanh %83 : vector<8x128xf32>
    %c8_i32_53 = arith.constant 8 : i32
    %85 = arith.muli %c7_i32, %c8_i32_53 : i32
    %86 = tpu.assume_multiple %85, 8 : i32
    %87 = arith.index_cast %86 : i32 to index
    %c0_54 = arith.constant 0 : index
    %88 = vector.load %arg3[%87, %c0_54] : memref<64x128xf32, #tpu.memory_space<vmem>>, vector<8x128xf32>
    tpu.vector_store %arg3[%87, %c0_54], %84 {strides = array<i32>} : memref<64x128xf32, #tpu.memory_space<vmem>>, vector<8x128xf32>,
    %c8_i32_55 = arith.constant 8 : i32
    %c0_56 = arith.constant 0 : index
    %c0_57 = arith.constant 0 : index
    %89 = vector.load %arg4[%c0_56, %c0_57] : memref<8x128xf32, #tpu.memory_space<vmem>>, vector<8x128xf32>
    tpu.vector_store %arg4[%c0_56, %c0_57], %84 {strides = array<i32>} : memref<8x128xf32, #tpu.memory_space<vmem>>, vector<8x128xf32>,
    return
  }
}

</mosaic_0001>

<llo_original>
// kernel: tpu_custom_call.1
$region0: #{tpu_custom_call.1}
  #allocation0 [shape = 'u32[]', space=smem, size = 0x4, offset = 0x4, fixed_abs, tag = 'smem constant byte address 0x4 - core index']
  #allocation1 [shape = 'u32[72,128]{1,0:T(1,128)}', space=vmem, size = 0x9000, scoped, tag = 'internal scratch']
  %s0 = inlined_call_operand.hbm [shape: f32[8,8,128], index: 0, kind: input, shape index: {}]
  %s1 = inlined_call_operand.hbm [shape: f32[8,128], index: 1, kind: input, shape index: {}, may-alias: {1,4}]
  %s2 = inlined_call_operand.hbm [shape: f32[128,128], index: 2, kind: input, shape index: {}]
  %s3 = inlined_call_operand.hbm [shape: f32[64,128], index: 3, kind: output, shape index: {0}]
  %s4 = inlined_call_operand.hbm [shape: f32[8,128], index: 4, kind: output, shape index: {1}, may-alias: {1,4}]
  %5 = xla_tuple %s3, %s4
  %s6 = sld [smem:[#allocation0]]
  $region42: #{tpu_custom_call.1} parent=0
    _
  %s8 = ssub.s32 1, %s6
  %s9 = scalar_select 0, %s8, %s6
  $region1: #{tpu_custom_call.1} parent=0
    #allocation2 [shape = 'u8[32768]{0}', space=vmem, size = 0x8000, scoped, tag = 'input window, operand 0, single buffered']
    #allocation3 [shape = 's32[1]{0}', space=sflag, size = 0x4, scoped, tag = 'scoped memory for tpu_custom_call.1']
    #allocation4 [shape = 's32[1]{0}', space=sflag, size = 0x4, scoped, tag = 'scoped memory for tpu_custom_call.1']
    #allocation5 [shape = 'u8[4096]{0}', space=vmem, size = 0x1000, scoped, tag = 'input window, operand 1, single buffered']
    #allocation6 [shape = 's32[1]{0}', space=sflag, size = 0x4, scoped, tag = 'scoped memory for tpu_custom_call.1']
    #allocation7 [shape = 'u8[65536]{0}', space=vmem, size = 0x10000, scoped, tag = 'input window, operand 2, single buffered']
    #allocation8 [shape = 'u8[32768]{0}', space=vmem, size = 0x8000, scoped, tag = 'output window, operand 0, single buffered']
    #allocation9 [shape = 'u8[4096]{0}', space=vmem, size = 0x1000, scoped, tag = 'output window, operand 1, single buffered']
    #allocation10 [shape = 's32[1]{0}', space=sflag, size = 0x4, scoped, tag = 'scoped memory for tpu_custom_call.1']
    %10 = vsyncpa [#allocation3], 0
    %11 = vsyncpa [#allocation6], 0
    %12 = vsyncpa [#allocation4], 0
    %13 = vsyncpa [#allocation10], 0
    // Predicated region
    $region2: #{tpu_custom_call.1} parent=1 // pred_check
      _
    $region3: #{tpu_custom_call.1} parent=1 // pred_check_branch
      %15 = sbr.rel (0) target = $region5
    $region4: #{tpu_custom_call.1} parent=1 // pred_region
      %17 = vsyncadd [#allocation3], 0
      %s18 = sshll.u32 %s0, 4
      %s19 = int_to_ptr.hbm [resolvable:$true] %s18
      %s20 = sshll.u32 [#allocation2], 4
      %s21 = int_to_ptr.vmem [resolvable:$true] %s20
      %26 = dma.hbm_to_vmem [thread:$0]  %s19, 1024, %s21, [#allocation3], 128, 128, 8
    $region5: #{tpu_custom_call.1} parent=1 // pred_fallthru
      _
    // Predicated region
    $region6: #{tpu_custom_call.1} parent=1 // pred_check
      _
    $region7: #{tpu_custom_call.1} parent=1 // pred_check_branch
      %28 = sbr.rel (0) target = $region9
    $region8: #{tpu_custom_call.1} parent=1 // pred_region
      %30 = vsyncadd [#allocation6], 0
      %s32 = sshll.u32 %s1, 4
      %s33 = int_to_ptr.hbm [resolvable:$true] %s32
      %s34 = sshll.u32 [#allocation5], 4
      %s35 = int_to_ptr.vmem [resolvable:$true] %s34
      %37 = dma.hbm_to_vmem [thread:$0]  %s33, 128, %s35, [#allocation6]
    $region9: #{tpu_custom_call.1} parent=1 // pred_fallthru
      _
    // Predicated region
    $region10: #{tpu_custom_call.1} parent=1 // pred_check
      _
    $region11: #{tpu_custom_call.1} parent=1 // pred_check_branch
      %39 = sbr.rel (0) target = $region13
    $region12: #{tpu_custom_call.1} parent=1 // pred_region
      %41 = vsyncadd [#allocation6], 0
      %s42 = sshll.u32 %s2, 4
      %s43 = int_to_ptr.hbm [resolvable:$true] %s42
      %s44 = sshll.u32 [#allocation7], 4
      %s45 = int_to_ptr.vmem [resolvable:$true] %s44
      %50 = dma.hbm_to_vmem [thread:$0]  %s43, 2048, %s45, [#allocation6], 128, 128, 8
    $region13: #{tpu_custom_call.1} parent=1 // pred_fallthru
      _
    // Predicated region
    $region14: #{tpu_custom_call.1} parent=1 // pred_check
      _
    $region15: #{tpu_custom_call.1} parent=1 // pred_check_branch
      %52 = sbr.rel (0) target = $region17
    $region16: #{tpu_custom_call.1} parent=1 // pred_region
      %54 = dma.done [#allocation3], 1024
    $region17: #{tpu_custom_call.1} parent=1 // pred_fallthru
      _
    // Predicated region
    $region18: #{tpu_custom_call.1} parent=1 // pred_check
      _
    $region19: #{tpu_custom_call.1} parent=1 // pred_check_branch
      %56 = sbr.rel (0) target = $region21
    $region20: #{tpu_custom_call.1} parent=1 // pred_region
      %58 = dma.done [#allocation6], 128
    $region21: #{tpu_custom_call.1} parent=1 // pred_fallthru
      _
    // Predicated region
    $region22: #{tpu_custom_call.1} parent=1 // pred_check
      _
    $region23: #{tpu_custom_call.1} parent=1 // pred_check_branch
      %60 = sbr.rel (0) target = $region25
    $region24: #{tpu_custom_call.1} parent=1 // pred_region
      %62 = dma.done [#allocation6], 2048
    $region25: #{tpu_custom_call.1} parent=1 // pred_fallthru
      _
    %v63 = vld [vmem:[#allocation5] sm:$0xff]
    %v64 = vld [vmem:[#allocation2] sm:$0xff]
    %v65 = vld [vmem:[#allocation7] sm:$0xff]
    %v66 = vld [vmem:[#allocation7 + $0x8] sm:$0xff]
    %v67 = vld [vmem:[#allocation7 + $0x10] sm:$0xff]
    %v68 = vld [vmem:[#allocation7 + $0x18] sm:$0xff]
    %v69 = vld [vmem:[#allocation7 + $0x20] sm:$0xff]
    %v70 = vld [vmem:[#allocation7 + $0x28] sm:$0xff]
    %v71 = vld [vmem:[#allocation7 + $0x30] sm:$0xff]
    %v72 = vld [vmem:[#allocation7 + $0x38] sm:$0xff]
    %v73 = vld [vmem:[#allocation7 + $0x40] sm:$0xff]
    %v74 = vld [vmem:[#allocation7 + $0x48] sm:$0xff]
    %v75 = vld [vmem:[#allocation7 + $0x50] sm:$0xff]
    %v76 = vld [vmem:[#allocation7 + $0x58] sm:$0xff]
    %v77 = vld [vmem:[#allocation7 + $0x60] sm:$0xff]
    %v78 = vld [vmem:[#allocation7 + $0x68] sm:$0xff]
    %v79 = vld [vmem:[#allocation7 + $0x70] sm:$0xff]
    %v80 = vld [vmem:[#allocation7 + $0x78] sm:$0xff]
    %81 = vmatpush.msra.mxu0 %v80
    %82 = vmatpush.msra.mxu0 %v79
    %83 = vmatpush.msra.mxu0 %v78
    %84 = vmatpush.msra.mxu0 %v77
    %85 = vmatpush.msra.mxu0 %v76
    %86 = vmatpush.msra.mxu0 %v75
    %87 = vmatpush.msra.mxu0 %v74
    %88 = vmatpush.msra.mxu0 %v73
    %89 = vmatpush.msra.mxu0 %v72
    %90 = vmatpush.msra.mxu0 %v71
    %91 = vmatpush.msra.mxu0 %v70
    %92 = vmatpush.msra.mxu0 %v69
    %93 = vmatpush.msra.mxu0 %v68
    %94 = vmatpush.msra.mxu0 %v67
    %95 = vmatpush.msra.mxu0 %v66
    %96 = vmatpush.msra.mxu0 %v65
    %97 = vmatmul.f32.gmra.mxu0 %v63
    %v98 = vpop.f32.mrf.mxu0
    %v99 = vadd.f32 0.0, %v98
    %100 = vdwg.mxu0
    %v101 = vadd.f32 %v64, %v99
    %v102 = vtanh.pop %v101
    %103 = vst [vmem:[#allocation8] sm:$0xff] %v102
    %s104 = scalar_lea.vmem [#allocation2], 8
    %v105 = vld [vmem:[%s104] sm:$0xff]
    %v106 = vld [vmem:[#allocation7] sm:$0xff]
    %v107 = vld [vmem:[#allocation7 + $0x8] sm:$0xff]
    %v108 = vld [vmem:[#allocation7 + $0x10] sm:$0xff]
    %v109 = vld [vmem:[#allocation7 + $0x18] sm:$0xff]
    %v110 = vld [vmem:[#allocation7 + $0x20] sm:$0xff]
    %v111 = vld [vmem:[#allocation7 + $0x28] sm:$0xff]
    %v112 = vld [vmem:[#allocation7 + $0x30] sm:$0xff]
    %v113 = vld [vmem:[#allocation7 + $0x38] sm:$0xff]
    %v114 = vld [vmem:[#allocation7 + $0x40] sm:$0xff]
    %v115 = vld [vmem:[#allocation7 + $0x48] sm:$0xff]
    %v116 = vld [vmem:[#allocation7 + $0x50] sm:$0xff]
    %v117 = vld [vmem:[#allocation7 + $0x58] sm:$0xff]
    %v118 = vld [vmem:[#allocation7 + $0x60] sm:$0xff]
    %v119 = vld [vmem:[#allocation7 + $0x68] sm:$0xff]
    %v120 = vld [vmem:[#allocation7 + $0x70] sm:$0xff]
    %v121 = vld [vmem:[#allocation7 + $0x78] sm:$0xff]
    %122 = vmatpush.msra.mxu0 %v121
    %123 = vmatpush.msra.mxu0 %v120
    %124 = vmatpush.msra.mxu0 %v119
    %125 = vmatpush.msra.mxu0 %v118
    %126 = vmatpush.msra.mxu0 %v117
    %127 = vmatpush.msra.mxu0 %v116
    %128 = vmatpush.msra.mxu0 %v115
    %129 = vmatpush.msra.mxu0 %v114
    %130 = vmatpush.msra.mxu0 %v113
    %131 = vmatpush.msra.mxu0 %v112
    %132 = vmatpush.msra.mxu0 %v111
    %133 = vmatpush.msra.mxu0 %v110
    %134 = vmatpush.msra.mxu0 %v109
    %135 = vmatpush.msra.mxu0 %v108
    %136 = vmatpush.msra.mxu0 %v107
    %137 = vmatpush.msra.mxu0 %v106
    %138 = vmatmul.f32.gmra.mxu0 %v102
    %v139 = vpop.f32.mrf.mxu0
    %v140 = vadd.f32 0.0, %v139
    %141 = vdwg.mxu0
    %v142 = vadd.f32 %v105, %v140
    %v143 = vtanh.pop %v142
    %s144 = scalar_lea.vmem [#allocation8], 8
    %145 = vst [vmem:[%s144] sm:$0xff] %v143
    %s146 = scalar_lea.vmem [#allocation2], 16
    %v147 = vld [vmem:[%s146] sm:$0xff]
    %v148 = vld [vmem:[#allocation7] sm:$0xff]
    %v149 = vld [vmem:[#allocation7 + $0x8] sm:$0xff]
    %v150 = vld [vmem:[#allocation7 + $0x10] sm:$0xff]
    %v151 = vld [vmem:[#allocation7 + $0x18] sm:$0xff]
    %v152 = vld [vmem:[#allocation7 + $0x20] sm:$0xff]
    %v153 = vld [vmem:[#allocation7 + $0x28] sm:$0xff]
    %v154 = vld [vmem:[#allocation7 + $0x30] sm:$0xff]
    %v155 = vld [vmem:[#allocation7 + $0x38] sm:$0xff]
    %v156 = vld [vmem:[#allocation7 + $0x40] sm:$0xff]
    %v157 = vld [vmem:[#allocation7 + $0x48] sm:$0xff]
    %v158 = vld [vmem:[#allocation7 + $0x50] sm:$0xff]
    %v159 = vld [vmem:[#allocation7 + $0x58] sm:$0xff]
    %v160 = vld [vmem:[#allocation7 + $0x60] sm:$0xff]
    %v161 = vld [vmem:[#allocation7 + $0x68] sm:$0xff]
    %v162 = vld [vmem:[#allocation7 + $0x70] sm:$0xff]
    %v163 = vld [vmem:[#allocation7 + $0x78] sm:$0xff]
    %164 = vmatpush.msra.mxu0 %v163
    %165 = vmatpush.msra.mxu0 %v162
    %166 = vmatpush.msra.mxu0 %v161
    %167 = vmatpush.msra.mxu0 %v160
    %168 = vmatpush.msra.mxu0 %v159
    %169 = vmatpush.msra.mxu0 %v158
    %170 = vmatpush.msra.mxu0 %v157
    %171 = vmatpush.msra.mxu0 %v156
    %172 = vmatpush.msra.mxu0 %v155
    %173 = vmatpush.msra.mxu0 %v154
    %174 = vmatpush.msra.mxu0 %v153
    %175 = vmatpush.msra.mxu0 %v152
    %176 = vmatpush.msra.mxu0 %v151
    %177 = vmatpush.msra.mxu0 %v150
    %178 = vmatpush.msra.mxu0 %v149
    %179 = vmatpush.msra.mxu0 %v148
    %180 = vmatmul.f32.gmra.mxu0 %v143
    %v181 = vpop.f32.mrf.mxu0
    %v182 = vadd.f32 0.0, %v181
    %183 = vdwg.mxu0
    %v184 = vadd.f32 %v147, %v182
    %v185 = vtanh.pop %v184
    %s186 = scalar_lea.vmem [#allocation8], 16
    %187 = vst [vmem:[%s186] sm:$0xff] %v185
    %s188 = scalar_lea.vmem [#allocation2], 24
    %v189 = vld [vmem:[%s188] sm:$0xff]
    %v190 = vld [vmem:[#allocation7] sm:$0xff]
    %v191 = vld [vmem:[#allocation7 + $0x8] sm:$0xff]
    %v192 = vld [vmem:[#allocation7 + $0x10] sm:$0xff]
    %v193 = vld [vmem:[#allocation7 + $0x18] sm:$0xff]
    %v194 = vld [vmem:[#allocation7 + $0x20] sm:$0xff]
    %v195 = vld [vmem:[#allocation7 + $0x28] sm:$0xff]
    %v196 = vld [vmem:[#allocation7 + $0x30] sm:$0xff]
    %v197 = vld [vmem:[#allocation7 + $0x38] sm:$0xff]
    %v198 = vld [vmem:[#allocation7 + $0x40] sm:$0xff]
    %v199 = vld [vmem:[#allocation7 + $0x48] sm:$0xff]
    %v200 = vld [vmem:[#allocation7 + $0x50] sm:$0xff]
    %v201 = vld [vmem:[#allocation7 + $0x58] sm:$0xff]
    %v202 = vld [vmem:[#allocation7 + $0x60] sm:$0xff]
    %v203 = vld [vmem:[#allocation7 + $0x68] sm:$0xff]
    %v204 = vld [vmem:[#allocation7 + $0x70] sm:$0xff]
    %v205 = vld [vmem:[#allocation7 + $0x78] sm:$0xff]
    %206 = vmatpush.msra.mxu0 %v205
    %207 = vmatpush.msra.mxu0 %v204
    %208 = vmatpush.msra.mxu0 %v203
    %209 = vmatpush.msra.mxu0 %v202
    %210 = vmatpush.msra.mxu0 %v201
    %211 = vmatpush.msra.mxu0 %v200
    %212 = vmatpush.msra.mxu0 %v199
    %213 = vmatpush.msra.mxu0 %v198
    %214 = vmatpush.msra.mxu0 %v197
    %215 = vmatpush.msra.mxu0 %v196
    %216 = vmatpush.msra.mxu0 %v195
    %217 = vmatpush.msra.mxu0 %v194
    %218 = vmatpush.msra.mxu0 %v193
    %219 = vmatpush.msra.mxu0 %v192
    %220 = vmatpush.msra.mxu0 %v191
    %221 = vmatpush.msra.mxu0 %v190
    %222 = vmatmul.f32.gmra.mxu0 %v185
    %v223 = vpop.f32.mrf.mxu0
    %v224 = vadd.f32 0.0, %v223
    %225 = vdwg.mxu0
    %v226 = vadd.f32 %v189, %v224
    %v227 = vtanh.pop %v226
    %s228 = scalar_lea.vmem [#allocation8], 24
    %229 = vst [vmem:[%s228] sm:$0xff] %v227
    %s230 = scalar_lea.vmem [#allocation2], 32
    %v231 = vld [vmem:[%s230] sm:$0xff]
    %v232 = vld [vmem:[#allocation7] sm:$0xff]
    %v233 = vld [vmem:[#allocation7 + $0x8] sm:$0xff]
    %v234 = vld [vmem:[#allocation7 + $0x10] sm:$0xff]
    %v235 = vld [vmem:[#allocation7 + $0x18] sm:$0xff]
    %v236 = vld [vmem:[#allocation7 + $0x20] sm:$0xff]
    %v237 = vld [vmem:[#allocation7 + $0x28] sm:$0xff]
    %v238 = vld [vmem:[#allocation7 + $0x30] sm:$0xff]
    %v239 = vld [vmem:[#allocation7 + $0x38] sm:$0xff]
    %v240 = vld [vmem:[#allocation7 + $0x40] sm:$0xff]
    %v241 = vld [vmem:[#allocation7 + $0x48] sm:$0xff]
    %v242 = vld [vmem:[#allocation7 + $0x50] sm:$0xff]
    %v243 = vld [vmem:[#allocation7 + $0x58] sm:$0xff]
    %v244 = vld [vmem:[#allocation7 + $0x60] sm:$0xff]
    %v245 = vld [vmem:[#allocation7 + $0x68] sm:$0xff]
    %v246 = vld [vmem:[#allocation7 + $0x70] sm:$0xff]
    %v247 = vld [vmem:[#allocation7 + $0x78] sm:$0xff]
    %248 = vmatpush.msra.mxu0 %v247
    %249 = vmatpush.msra.mxu0 %v246
    %250 = vmatpush.msra.mxu0 %v245
    %251 = vmatpush.msra.mxu0 %v244
    %252 = vmatpush.msra.mxu0 %v243
    %253 = vmatpush.msra.mxu0 %v242
    %254 = vmatpush.msra.mxu0 %v241
    %255 = vmatpush.msra.mxu0 %v240
    %256 = vmatpush.msra.mxu0 %v239
    %257 = vmatpush.msra.mxu0 %v238
    %258 = vmatpush.msra.mxu0 %v237
    %259 = vmatpush.msra.mxu0 %v236
    %260 = vmatpush.msra.mxu0 %v235
    %261 = vmatpush.msra.mxu0 %v234
    %262 = vmatpush.msra.mxu0 %v233
    %263 = vmatpush.msra.mxu0 %v232
    %264 = vmatmul.f32.gmra.mxu0 %v227
    %v265 = vpop.f32.mrf.mxu0
    %v266 = vadd.f32 0.0, %v265
    %267 = vdwg.mxu0
    %v268 = vadd.f32 %v231, %v266
    %v269 = vtanh.pop %v268
    %s270 = scalar_lea.vmem [#allocation8], 32
    %271 = vst [vmem:[%s270] sm:$0xff] %v269
    %s272 = scalar_lea.vmem [#allocation2], 40
    %v273 = vld [vmem:[%s272] sm:$0xff]
    %v274 = vld [vmem:[#allocation7] sm:$0xff]
    %v275 = vld [vmem:[#allocation7 + $0x8] sm:$0xff]
    %v276 = vld [vmem:[#allocation7 + $0x10] sm:$0xff]
    %v277 = vld [vmem:[#allocation7 + $0x18] sm:$0xff]
    %v278 = vld [vmem:[#allocation7 + $0x20] sm:$0xff]
    %v279 = vld [vmem:[#allocation7 + $0x28] sm:$0xff]
    %v280 = vld [vmem:[#allocation7 + $0x30] sm:$0xff]
    %v281 = vld [vmem:[#allocation7 + $0x38] sm:$0xff]
    %v282 = vld [vmem:[#allocation7 + $0x40] sm:$0xff]
    %v283 = vld [vmem:[#allocation7 + $0x48] sm:$0xff]
    %v284 = vld [vmem:[#allocation7 + $0x50] sm:$0xff]
    %v285 = vld [vmem:[#allocation7 + $0x58] sm:$0xff]
    %v286 = vld [vmem:[#allocation7 + $0x60] sm:$0xff]
    %v287 = vld [vmem:[#allocation7 + $0x68] sm:$0xff]
    %v288 = vld [vmem:[#allocation7 + $0x70] sm:$0xff]
    %v289 = vld [vmem:[#allocation7 + $0x78] sm:$0xff]
    %290 = vmatpush.msra.mxu0 %v289
    %291 = vmatpush.msra.mxu0 %v288
    %292 = vmatpush.msra.mxu0 %v287
    %293 = vmatpush.msra.mxu0 %v286
    %294 = vmatpush.msra.mxu0 %v285
    %295 = vmatpush.msra.mxu0 %v284
    %296 = vmatpush.msra.mxu0 %v283
    %297 = vmatpush.msra.mxu0 %v282
    %298 = vmatpush.msra.mxu0 %v281
    %299 = vmatpush.msra.mxu0 %v280
    %300 = vmatpush.msra.mxu0 %v279
    %301 = vmatpush.msra.mxu0 %v278
    %302 = vmatpush.msra.mxu0 %v277
    %303 = vmatpush.msra.mxu0 %v276
    %304 = vmatpush.msra.mxu0 %v275
    %305 = vmatpush.msra.mxu0 %v274
    %306 = vmatmul.f32.gmra.mxu0 %v269
    %v307 = vpop.f32.mrf.mxu0
    %v308 = vadd.f32 0.0, %v307
    %309 = vdwg.mxu0
    %v310 = vadd.f32 %v273, %v308
    %v311 = vtanh.pop %v310
    %s312 = scalar_lea.vmem [#allocation8], 40
    %313 = vst [vmem:[%s312] sm:$0xff] %v311
    %s314 = scalar_lea.vmem [#allocation2], 48
    %v315 = vld [vmem:[%s314] sm:$0xff]
    %v316 = vld [vmem:[#allocation7] sm:$0xff]
    %v317 = vld [vmem:[#allocation7 + $0x8] sm:$0xff]
    %v318 = vld [vmem:[#allocation7 + $0x10] sm:$0xff]
    %v319 = vld [vmem:[#allocation7 + $0x18] sm:$0xff]
    %v320 = vld [vmem:[#allocation7 + $0x20] sm:$0xff]
    %v321 = vld [vmem:[#allocation7 + $0x28] sm:$0xff]
    %v322 = vld [vmem:[#allocation7 + $0x30] sm:$0xff]
    %v323 = vld [vmem:[#allocation7 + $0x38] sm:$0xff]
    %v324 = vld [vmem:[#allocation7 + $0x40] sm:$0xff]
    %v325 = vld [vmem:[#allocation7 + $0x48] sm:$0xff]
    %v326 = vld [vmem:[#allocation7 + $0x50] sm:$0xff]
    %v327 = vld [vmem:[#allocation7 + $0x58] sm:$0xff]
    %v328 = vld [vmem:[#allocation7 + $0x60] sm:$0xff]
    %v329 = vld [vmem:[#allocation7 + $0x68] sm:$0xff]
    %v330 = vld [vmem:[#allocation7 + $0x70] sm:$0xff]
    %v331 = vld [vmem:[#allocation7 + $0x78] sm:$0xff]
    %332 = vmatpush.msra.mxu0 %v331
    %333 = vmatpush.msra.mxu0 %v330
    %334 = vmatpush.msra.mxu0 %v329
    %335 = vmatpush.msra.mxu0 %v328
    %336 = vmatpush.msra.mxu0 %v327
    %337 = vmatpush.msra.mxu0 %v326
    %338 = vmatpush.msra.mxu0 %v325
    %339 = vmatpush.msra.mxu0 %v324
    %340 = vmatpush.msra.mxu0 %v323
    %341 = vmatpush.msra.mxu0 %v322
    %342 = vmatpush.msra.mxu0 %v321
    %343 = vmatpush.msra.mxu0 %v320
    %344 = vmatpush.msra.mxu0 %v319
    %345 = vmatpush.msra.mxu0 %v318
    %346 = vmatpush.msra.mxu0 %v317
    %347 = vmatpush.msra.mxu0 %v316
    %348 = vmatmul.f32.gmra.mxu0 %v311
    %v349 = vpop.f32.mrf.mxu0
    %v350 = vadd.f32 0.0, %v349
    %351 = vdwg.mxu0
    %v352 = vadd.f32 %v315, %v350
    %v353 = vtanh.pop %v352
    %s354 = scalar_lea.vmem [#allocation8], 48
    %355 = vst [vmem:[%s354] sm:$0xff] %v353
    %s356 = scalar_lea.vmem [#allocation2], 56
    %v357 = vld [vmem:[%s356] sm:$0xff]
    %v358 = vld [vmem:[#allocation7] sm:$0xff]
    %v359 = vld [vmem:[#allocation7 + $0x8] sm:$0xff]
    %v360 = vld [vmem:[#allocation7 + $0x10] sm:$0xff]
    %v361 = vld [vmem:[#allocation7 + $0x18] sm:$0xff]
    %v362 = vld [vmem:[#allocation7 + $0x20] sm:$0xff]
    %v363 = vld [vmem:[#allocation7 + $0x28] sm:$0xff]
    %v364 = vld [vmem:[#allocation7 + $0x30] sm:$0xff]
    %v365 = vld [vmem:[#allocation7 + $0x38] sm:$0xff]
    %v366 = vld [vmem:[#allocation7 + $0x40] sm:$0xff]
    %v367 = vld [vmem:[#allocation7 + $0x48] sm:$0xff]
    %v368 = vld [vmem:[#allocation7 + $0x50] sm:$0xff]
    %v369 = vld [vmem:[#allocation7 + $0x58] sm:$0xff]
    %v370 = vld [vmem:[#allocation7 + $0x60] sm:$0xff]
    %v371 = vld [vmem:[#allocation7 + $0x68] sm:$0xff]
    %v372 = vld [vmem:[#allocation7 + $0x70] sm:$0xff]
    %v373 = vld [vmem:[#allocation7 + $0x78] sm:$0xff]
    %374 = vmatpush.msra.mxu0 %v373
    %375 = vmatpush.msra.mxu0 %v372
    %376 = vmatpush.msra.mxu0 %v371
    %377 = vmatpush.msra.mxu0 %v370
    %378 = vmatpush.msra.mxu0 %v369
    %379 = vmatpush.msra.mxu0 %v368
    %380 = vmatpush.msra.mxu0 %v367
    %381 = vmatpush.msra.mxu0 %v366
    %382 = vmatpush.msra.mxu0 %v365
    %383 = vmatpush.msra.mxu0 %v364
    %384 = vmatpush.msra.mxu0 %v363
    %385 = vmatpush.msra.mxu0 %v362
    %386 = vmatpush.msra.mxu0 %v361
    %387 = vmatpush.msra.mxu0 %v360
    %388 = vmatpush.msra.mxu0 %v359
    %389 = vmatpush.msra.mxu0 %v358
    %390 = vmatmul.f32.gmra.mxu0 %v353
    %v391 = vpop.f32.mrf.mxu0
    %v392 = vadd.f32 0.0, %v391
    %393 = vdwg.mxu0
    %v394 = vadd.f32 %v357, %v392
    %v395 = vtanh.pop %v394
    %s396 = scalar_lea.vmem [#allocation8], 56
    %397 = vst [vmem:[%s396] sm:$0xff] %v395
    %398 = vst [vmem:[#allocation9] sm:$0xff] %v395
    // Predicated region
    $region26: #{tpu_custom_call.1} parent=1 // pred_check
      _
    $region27: #{tpu_custom_call.1} parent=1 // pred_check_branch
      %400 = sbr.rel (0) target = $region29
    $region28: #{tpu_custom_call.1} parent=1 // pred_region
      %402 = vsyncadd [#allocation4], 0
      %s403 = sshll.u32 [#allocation8], 4
      %s404 = int_to_ptr.vmem [resolvable:$true] %s403
      %s405 = sshll.u32 %s3, 4
      %s406 = int_to_ptr.hbm [resolvable:$true] %s405
      %411 = dma.vmem_to_hbm [thread:$0]  %s404, 1024, %s406, [#allocation4], 128, 128, 8
    $region29: #{tpu_custom_call.1} parent=1 // pred_fallthru
      _
    // Predicated region
    $region30: #{tpu_custom_call.1} parent=1 // pred_check
      _
    $region31: #{tpu_custom_call.1} parent=1 // pred_check_branch
      %413 = sbr.rel (0) target = $region33
    $region32: #{tpu_custom_call.1} parent=1 // pred_region
      %415 = vsyncadd [#allocation10], 0
      %s417 = sshll.u32 [#allocation9], 4
      %s418 = int_to_ptr.vmem [resolvable:$true] %s417
      %s419 = sshll.u32 %s4, 4
      %s420 = int_to_ptr.hbm [resolvable:$true] %s419
      %422 = dma.vmem_to_hbm [thread:$0]  %s418, 128, %s420, [#allocation10]
    $region33: #{tpu_custom_call.1} parent=1 // pred_fallthru
      _
    // Predicated region
    $region34: #{tpu_custom_call.1} parent=1 // pred_check
      _
    $region35: #{tpu_custom_call.1} parent=1 // pred_check_branch
      %424 = sbr.rel (0) target = $region37
    $region36: #{tpu_custom_call.1} parent=1 // pred_region
      %426 = dma.done [#allocation4], 1024
    $region37: #{tpu_custom_call.1} parent=1 // pred_fallthru
      _
    // Predicated region
    $region38: #{tpu_custom_call.1} parent=1 // pred_check
      _
    $region39: #{tpu_custom_call.1} parent=1 // pred_check_branch
      %428 = sbr.rel (0) target = $region41
    $region40: #{tpu_custom_call.1} parent=1 // pred_region
      %430 = dma.done [#allocation10], 128
    $region41: #{tpu_custom_call.1} parent=1 // pred_fallthru
      _
    %431 = vsyncpa [#allocation3], 1
    %432 = vsyncpa [#allocation6], 1
    %433 = vsyncpa [#allocation4], 1
    %434 = vsyncpa [#allocation10], 1

</llo_original>
